<compile_context>
chip_gen: v7x
topology: tpu7x:2x2x1
jax: 0.10.0
libtpu: 0.0.40
codegen_flags: <defaults>
</compile_context>

<pallas_src>
import functools

import jax
import jax.numpy as jnp
from jax.experimental import pallas as pl
from jax.experimental.pallas import tpu as pltpu


def _round_up(x: int, m: int) -> int:
    return ((x + m - 1) // m) * m


def _mlp_kernel(x_ref, w1_ref, b1_ref, w2_ref, b2_ref, o_ref):
    # x: (TB, D), w1: (D, Hp), b1: (1, Hp) f32, w2: (Hp, Cp), b2: (1, Cp) f32
    h = jnp.dot(x_ref[...], w1_ref[...], preferred_element_type=jnp.float32)
    h = jnp.maximum(h + b1_ref[...], 0.0)                     # fc1 bias + ReLU
    out = jnp.dot(h.astype(w2_ref.dtype), w2_ref[...],
                  preferred_element_type=jnp.float32)
    o_ref[...] = (out + b2_ref[...]).astype(o_ref.dtype)      # fc2 bias


def prepare_net_params(w1, b1, w2, b2, compute_dtype=None):
    """One-time lane-dense padding of the parameters (hoisted out of the
    per-call jit path).  Returns (w1p, b1p, w2p, b2p).

    w1: (D, hidden)  (transposed vs. PyTorch's (hidden, D))
    w2: (hidden, num_classes)
    Pass compute_dtype=jnp.bfloat16 (and feed bf16 activations at rest) for
    the mem-bound bf16 path on v6e/v7x; accumulation stays f32 in-kernel.
    """
    D, H = w1.shape
    H2, C = w2.shape
    assert H2 == H, (w1.shape, w2.shape)
    dt = jnp.dtype(compute_dtype) if compute_dtype is not None else w1.dtype
    Hp = _round_up(max(H, 128), 128)
    Cp = _round_up(max(C, 128), 128)
    w1p = jnp.zeros((D, Hp), dt).at[:, :H].set(w1.astype(dt))
    w2p = jnp.zeros((Hp, Cp), dt).at[:H, :C].set(w2.astype(dt))
    b1p = jnp.zeros((1, Hp), jnp.float32).at[0, :H].set(b1.astype(jnp.float32))
    b2p = jnp.zeros((1, Cp), jnp.float32).at[0, :C].set(b2.astype(jnp.float32))
    return w1p, b1p, w2p, b2p


@functools.partial(jax.jit, static_argnames=("num_classes", "block_b"))
def net_forward(x_nchw, w1p, b1p, w2p, b2p, *, num_classes: int,
                block_b: int = 2048):
    """Fused fc1 -> ReLU -> fc2 forward pass.

    x_nchw : (B, C, H, W) (or any (B, ...) that flattens to D features)
    w1p/b1p/w2p/b2p : pre-padded params from prepare_net_params()
    returns: (B, num_classes)
    """
    B = x_nchw.shape[0]
    x = x_nchw.reshape(B, -1)
    D, Hp = w1p.shape
    Cp = w2p.shape[1]
    assert x.shape[1] == D, (x.shape, D)

    cdt = w1p.dtype
    if x.dtype != cdt:
        # NOTE: for the bf16 path, convert x upstream / at rest instead -- this
        # astype is an extra HBM pass that eats most of the bf16 read savings.
        x = x.astype(cdt)
    out_dt = x_nchw.dtype

    itemsize = jnp.dtype(cdt).itemsize
    out_itemsize = jnp.dtype(out_dt).itemsize
    weight_bytes = ((w1p.size + w2p.size) * itemsize
                    + (b1p.size + b2p.size) * 4)

    # ---- generation-aware VMEM budget (v7x: 64 MiB/TC, v5e/v6e: 128 MiB) ----
    try:
        vmem_cap = int(pltpu.get_tpu_info().vmem_capacity_bytes)
    except Exception:
        vmem_cap = 64 * 1024 * 1024        # conservative (v7x per-TC)
    tile_budget = int(vmem_cap * 0.625)    # ~40 MiB on v7x, ~80 MiB on v5e/v6e

    def vmem_est(tb):
        return (2 * tb * D * itemsize          # double-buffered x tile
                + 2 * tb * Cp * out_itemsize   # double-buffered out tile
                + 2 * weight_bytes)            # resident weights (x2 margin)

    # ---- batch tile: big, sublane-aligned, >=2 grid steps when possible ----
    TB = max(8, min(_round_up(block_b, 8), _round_up(B, 8)))
    if B > 8:
        # keep the grid >= 2 steps: enables v7x megacore sharding of the
        # "parallel" batch axis and lets the x-DMA double-buffer overlap.
        TB = min(TB, _round_up((B + 1) // 2, 8))
    while TB > 8 and vmem_est(TB) > tile_budget:
        TB = max(8, _round_up(TB // 2, 8))

    grid = (pl.cdiv(B, TB),)   # ragged last block is masked by Pallas; no x pad
    vmem_limit = int(min(vmem_cap - 8 * 1024 * 1024,
                         max(vmem_est(TB) + 4 * 1024 * 1024, 32 * 1024 * 1024)))

    out_padded = pl.pallas_call(
        _mlp_kernel,
        out_shape=jax.ShapeDtypeStruct((B, Cp), out_dt),
        grid=grid,
        in_specs=[
            pl.BlockSpec((TB, D), lambda i: (i, 0)),    # x tile (pipelined)
            pl.BlockSpec((D, Hp), lambda i: (0, 0)),    # w1 (VMEM-resident)
            pl.BlockSpec((1, Hp), lambda i: (0, 0)),    # b1
            pl.BlockSpec((Hp, Cp), lambda i: (0, 0)),   # w2
            pl.BlockSpec((1, Cp), lambda i: (0, 0)),    # b2
        ],
        out_specs=pl.BlockSpec((TB, Cp), lambda i: (i, 0)),  # lane-dense store
        compiler_params=pltpu.CompilerParams(
            dimension_semantics=("parallel",),          # megacore on v7x
            vmem_limit_bytes=vmem_limit,
        ),
    )(x, w1p, b1p, w2p, b2p)

    # Consumers that can work on the (B, 128) slab directly should skip this.
    return out_padded[:, :num_classes]


def _reference(x_nchw, w1, b1, w2, b2):
    x = x_nchw.reshape(x_nchw.shape[0], -1).astype(jnp.float32)
    h = jnp.maximum(x @ w1 + b1, 0.0)
    return h @ w2 + b2


if __name__ == "__main__":
    # Small shapes consistent with the module: flattened image -> hidden -> 10.
    B, Cin, Himg, Wimg = 2, 4, 16, 16          # input_size = 4*16*16 = 1024
    hidden_size = 64
    num_classes = 10
    input_size = Cin * Himg * Wimg

    key = jax.random.PRNGKey(0)
    kx, k1, kb1, k2, kb2 = jax.random.split(key, 5)

    x = jax.random.normal(kx, (B, Cin, Himg, Wimg), dtype=jnp.float32)

    # Deterministic parameter init (uniform, PyTorch-Linear-like scaling).
    bound1 = 1.0 / (input_size ** 0.5)
    w1 = jax.random.uniform(k1, (input_size, hidden_size),
                            minval=-bound1, maxval=bound1, dtype=jnp.float32)
    b1 = jax.random.uniform(kb1, (hidden_size,),
                            minval=-bound1, maxval=bound1, dtype=jnp.float32)
    bound2 = 1.0 / (hidden_size ** 0.5)
    w2 = jax.random.uniform(k2, (hidden_size, num_classes),
                            minval=-bound2, maxval=bound2, dtype=jnp.float32)
    b2 = jax.random.uniform(kb2, (num_classes,),
                            minval=-bound2, maxval=bound2, dtype=jnp.float32)

    # Pad params once (hoisted out of the per-call path), then run the kernel.
    params = prepare_net_params(w1, b1, w2, b2)          # f32 path (bit-tight)
    out = net_forward(x, *params, num_classes=num_classes)
    out = jax.block_until_ready(out)

    ref = _reference(x, w1, b1, w2, b2)
    assert out.shape == (B, num_classes), out.shape
    assert jnp.allclose(out, ref, atol=1e-4, rtol=1e-4)

    print("KERNEL_OK")
</pallas_src>

<mosaic_0001>
module attributes {stable_mosaic.version = 11 : i64} {
  func.func @_mlp_kernel(%arg0: i32, %arg1: memref<8x1024xf32, #tpu.memory_space<vmem>>, %arg2: memref<1024x128xf32, #tpu.memory_space<vmem>>, %arg3: memref<1x128xf32, #tpu.memory_space<vmem>>, %arg4: memref<128x128xf32, #tpu.memory_space<vmem>>, %arg5: memref<1x128xf32, #tpu.memory_space<vmem>>, %arg6: memref<8x128xf32, #tpu.memory_space<vmem>>) attributes {dimension_semantics = [#tpu.dimension_semantics<parallel>], iteration_bounds = array<i64: 1>, scalar_prefetch = 0 : i64, scratch_operands = 0 : i64, tpu.core_type = #tpu.core_type<tc>, window_params = [{transform_indices = @transform_0, window_bounds = array<i64: 8, 1024>}, {pipeline_mode = #tpu.pipeline_mode<synchronous>, transform_indices = @transform_1, window_bounds = array<i64: 1024, 128>}, {pipeline_mode = #tpu.pipeline_mode<synchronous>, transform_indices = @transform_2, window_bounds = array<i64: 1, 128>}, {pipeline_mode = #tpu.pipeline_mode<synchronous>, transform_indices = @transform_3, window_bounds = array<i64: 128, 128>}, {pipeline_mode = #tpu.pipeline_mode<synchronous>, transform_indices = @transform_4, window_bounds = array<i64: 1, 128>}, {transform_indices = @transform_5, window_bounds = array<i64: 8, 128>}]} {
    %c0 = arith.constant 0 : index
    %c0_0 = arith.constant 0 : index
    %0 = vector.load %arg1[%c0, %c0_0] : memref<8x1024xf32, #tpu.memory_space<vmem>>, vector<8x1024xf32>
    %c0_1 = arith.constant 0 : index
    %c0_2 = arith.constant 0 : index
    %1 = vector.load %arg2[%c0_1, %c0_2] : memref<1024x128xf32, #tpu.memory_space<vmem>>, vector<1024x128xf32>
    %cst = arith.constant dense<0.000000e+00> : vector<8x128xf32>
    %2 = tpu.matmul %0, %1, %cst {dimension_numbers = #tpu.dot_dimension_numbers<[1], [0], [0], [1], [0, 0, 1, 1], [], []>} : vector<8x1024xf32>, vector<1024x128xf32>, vector<8x128xf32> -> vector<8x128xf32>
    %c0_3 = arith.constant 0 : index
    %c0_4 = arith.constant 0 : index
    %3 = vector.load %arg3[%c0_3, %c0_4] : memref<1x128xf32, #tpu.memory_space<vmem>>, vector<1x128xf32>
    %4 = vector.broadcast %3 : vector<1x128xf32> to vector<8x128xf32>
    %5 = arith.addf %2, %4 : vector<8x128xf32>
    %cst_5 = arith.constant 0.000000e+00 : f32
    %6 = vector.broadcast %cst_5 : f32 to vector<8x128xf32>
    %7 = arith.maximumf %5, %6 : vector<8x128xf32>
    %c0_6 = arith.constant 0 : index
    %c0_7 = arith.constant 0 : index
    %8 = vector.load %arg4[%c0_6, %c0_7] : memref<128x128xf32, #tpu.memory_space<vmem>>, vector<128x128xf32>
    %cst_8 = arith.constant dense<0.000000e+00> : vector<8x128xf32>
    %9 = tpu.matmul %7, %8, %cst_8 {dimension_numbers = #tpu.dot_dimension_numbers<[1], [0], [0], [1], [0, 0, 1, 1], [], []>} : vector<8x128xf32>, vector<128x128xf32>, vector<8x128xf32> -> vector<8x128xf32>
    %c0_9 = arith.constant 0 : index
    %c0_10 = arith.constant 0 : index
    %10 = vector.load %arg5[%c0_9, %c0_10] : memref<1x128xf32, #tpu.memory_space<vmem>>, vector<1x128xf32>
    %11 = vector.broadcast %10 : vector<1x128xf32> to vector<8x128xf32>
    %12 = arith.addf %9, %11 : vector<8x128xf32>
    %c0_11 = arith.constant 0 : index
    %c0_12 = arith.constant 0 : index
    %13 = vector.load %arg6[%c0_11, %c0_12] : memref<8x128xf32, #tpu.memory_space<vmem>>, vector<8x128xf32>
    tpu.vector_store %arg6[%c0_11, %c0_12], %12 {strides = array<i32>} : memref<8x128xf32, #tpu.memory_space<vmem>>, vector<8x128xf32>,
    return
  }
  func.func @transform_0(%arg0: i32) -> (i32, i32) {
    %c0_i32 = arith.constant 0 : i32
    %c0_i32_0 = arith.constant 0 : i32
    return %arg0, %c0_i32 : i32, i32
  }
  func.func @transform_1(%arg0: i32) -> (i32, i32) {
    %c0_i32 = arith.constant 0 : i32
    %c0_i32_0 = arith.constant 0 : i32
    %c0_i32_1 = arith.constant 0 : i32
    return %c0_i32, %c0_i32_0 : i32, i32
  }
  func.func @transform_2(%arg0: i32) -> (i32, i32) {
    %c0_i32 = arith.constant 0 : i32
    %c0_i32_0 = arith.constant 0 : i32
    %c0_i32_1 = arith.constant 0 : i32
    return %c0_i32, %c0_i32_0 : i32, i32
  }
  func.func @transform_3(%arg0: i32) -> (i32, i32) {
    %c0_i32 = arith.constant 0 : i32
    %c0_i32_0 = arith.constant 0 : i32
    %c0_i32_1 = arith.constant 0 : i32
    return %c0_i32, %c0_i32_0 : i32, i32
  }
  func.func @transform_4(%arg0: i32) -> (i32, i32) {
    %c0_i32 = arith.constant 0 : i32
    %c0_i32_0 = arith.constant 0 : i32
    %c0_i32_1 = arith.constant 0 : i32
    return %c0_i32, %c0_i32_0 : i32, i32
  }
  func.func @transform_5(%arg0: i32) -> (i32, i32) {
    %c0_i32 = arith.constant 0 : i32
    %c0_i32_0 = arith.constant 0 : i32
    return %arg0, %c0_i32 : i32, i32
  }
}

</mosaic_0001>

<llo_original>
// kernel: net_forward.1
$region0: #{net_forward.1}
  #allocation0 [shape = 'u32[]', space=smem, size = 0x4, offset = 0x4, fixed_abs, tag = 'smem constant byte address 0x4 - core index']
  #allocation1 [shape = 'u32[144,128]{1,0:T(1,128)}', space=vmem, size = 0x12000, scoped, tag = 'internal scratch']
  %s0 = inlined_call_operand.vmem [shape: f32[2,1024], index: 0, kind: input, shape index: {}]
  %s1 = inlined_call_operand.hbm [shape: f32[1024,128], index: 1, kind: input, shape index: {}]
  %s2 = inlined_call_operand.vmem [shape: f32[1,128], index: 2, kind: input, shape index: {}]
  %s3 = inlined_call_operand.vmem [shape: f32[128,128], index: 3, kind: input, shape index: {}]
  %s4 = inlined_call_operand.vmem [shape: f32[1,128], index: 4, kind: input, shape index: {}]
  %s5 = inlined_call_operand.hbm [shape: f32[2,128], index: 5, kind: output, shape index: {}]
  %s6 = sld [smem:[#allocation0]]
  $region34: #{net_forward.1} parent=0
    _
  %s8 = ssub.s32 1, %s6
  %s9 = scalar_select 0, %s8, %s6
  $region1: #{net_forward.1} parent=0
    #allocation2 [shape = 'u8[524288]{0}', space=vmem, size = 0x80000, scoped, tag = 'input window, operand 1, single buffered']
    #allocation3 [shape = 's32[1]{0}', space=sflag, size = 0x4, scoped, tag = 'scoped memory for net_forward.1']
    #allocation4 [shape = 's32[1]{0}', space=sflag, size = 0x4, scoped, tag = 'scoped memory for net_forward.1']
    #allocation5 [shape = 'u8[4096]{0}', space=vmem, size = 0x1000, scoped, tag = 'output window, operand 0, single buffered']
    %10 = vsyncpa [#allocation3], 0
    %11 = vsyncpa [#allocation4], 0
    // Predicated region
    $region2: #{net_forward.1} parent=1 // pred_check
      _
    $region3: #{net_forward.1} parent=1 // pred_check_branch
      %13 = sbr.rel (0) target = $region5
    $region4: #{net_forward.1} parent=1 // pred_region
      _
    $region5: #{net_forward.1} parent=1 // pred_fallthru
      _
    // Predicated region
    $region6: #{net_forward.1} parent=1 // pred_check
      _
    $region7: #{net_forward.1} parent=1 // pred_check_branch
      %15 = sbr.rel (0) target = $region9
    $region8: #{net_forward.1} parent=1 // pred_region
      %s17 = ssub.s32 16384, 16384
      %18 = vsyncadd [#allocation3], %s17
      %s19 = sshll.u32 [#allocation2], 4
      %s20 = int_to_ptr.vmem [resolvable:$true] %s19
      %25 = dma.hbm_to_vmem [thread:$0]  %s1, 16384, %s20, [#allocation3], 128, 128, 8
    $region9: #{net_forward.1} parent=1 // pred_fallthru
      _
    // Predicated region
    $region10: #{net_forward.1} parent=1 // pred_check
      _
    $region11: #{net_forward.1} parent=1 // pred_check_branch
      %27 = sbr.rel (0) target = $region13
    $region12: #{net_forward.1} parent=1 // pred_region
      _
    $region13: #{net_forward.1} parent=1 // pred_fallthru
      _
    // Predicated region
    $region14: #{net_forward.1} parent=1 // pred_check
      _
    $region15: #{net_forward.1} parent=1 // pred_check_branch
      %29 = sbr.rel (0) target = $region17
    $region16: #{net_forward.1} parent=1 // pred_region
      _
    $region17: #{net_forward.1} parent=1 // pred_fallthru
      _
    // Predicated region
    $region18: #{net_forward.1} parent=1 // pred_check
      _
    $region19: #{net_forward.1} parent=1 // pred_check_branch
      %31 = sbr.rel (0) target = $region21
    $region20: #{net_forward.1} parent=1 // pred_region
      _
    $region21: #{net_forward.1} parent=1 // pred_fallthru
      _
    // Predicated region
    $region22: #{net_forward.1} parent=1 // pred_check
      _
    $region23: #{net_forward.1} parent=1 // pred_check_branch
      %33 = sbr.rel (0) target = $region25
    $region24: #{net_forward.1} parent=1 // pred_region
      %34 = dma.done [#allocation3], 16384
    $region25: #{net_forward.1} parent=1 // pred_fallthru
      _
    %v35 = vld [vmem:[%s0] sm:$0xff]
    %v36 = vld [vmem:[%s0 + $0x8] sm:$0xff]
    %v37 = vld [vmem:[%s0 + $0x10] sm:$0xff]
    %v38 = vld [vmem:[%s0 + $0x18] sm:$0xff]
    %v39 = vld [vmem:[%s0 + $0x20] sm:$0xff]
    %v40 = vld [vmem:[%s0 + $0x28] sm:$0xff]
    %v41 = vld [vmem:[%s0 + $0x30] sm:$0xff]
    %v42 = vld [vmem:[%s0 + $0x38] sm:$0xff]
    %v43 = vld [vmem:[#allocation2] sm:$0xff]
    %v44 = vld [vmem:[#allocation2 + $0x8] sm:$0xff]
    %v45 = vld [vmem:[#allocation2 + $0x10] sm:$0xff]
    %v46 = vld [vmem:[#allocation2 + $0x18] sm:$0xff]
    %v47 = vld [vmem:[#allocation2 + $0x20] sm:$0xff]
    %v48 = vld [vmem:[#allocation2 + $0x28] sm:$0xff]
    %v49 = vld [vmem:[#allocation2 + $0x30] sm:$0xff]
    %v50 = vld [vmem:[#allocation2 + $0x38] sm:$0xff]
    %v51 = vld [vmem:[#allocation2 + $0x40] sm:$0xff]
    %v52 = vld [vmem:[#allocation2 + $0x48] sm:$0xff]
    %v53 = vld [vmem:[#allocation2 + $0x50] sm:$0xff]
    %v54 = vld [vmem:[#allocation2 + $0x58] sm:$0xff]
    %v55 = vld [vmem:[#allocation2 + $0x60] sm:$0xff]
    %v56 = vld [vmem:[#allocation2 + $0x68] sm:$0xff]
    %v57 = vld [vmem:[#allocation2 + $0x70] sm:$0xff]
    %v58 = vld [vmem:[#allocation2 + $0x78] sm:$0xff]
    %v59 = vld [vmem:[#allocation2 + $0x80] sm:$0xff]
    %v60 = vld [vmem:[#allocation2 + $0x88] sm:$0xff]
    %v61 = vld [vmem:[#allocation2 + $0x90] sm:$0xff]
    %v62 = vld [vmem:[#allocation2 + $0x98] sm:$0xff]
    %v63 = vld [vmem:[#allocation2 + $0xa0] sm:$0xff]
    %v64 = vld [vmem:[#allocation2 + $0xa8] sm:$0xff]
    %v65 = vld [vmem:[#allocation2 + $0xb0] sm:$0xff]
    %v66 = vld [vmem:[#allocation2 + $0xb8] sm:$0xff]
    %v67 = vld [vmem:[#allocation2 + $0xc0] sm:$0xff]
    %v68 = vld [vmem:[#allocation2 + $0xc8] sm:$0xff]
    %v69 = vld [vmem:[#allocation2 + $0xd0] sm:$0xff]
    %v70 = vld [vmem:[#allocation2 + $0xd8] sm:$0xff]
    %v71 = vld [vmem:[#allocation2 + $0xe0] sm:$0xff]
    %v72 = vld [vmem:[#allocation2 + $0xe8] sm:$0xff]
    %v73 = vld [vmem:[#allocation2 + $0xf0] sm:$0xff]
    %v74 = vld [vmem:[#allocation2 + $0xf8] sm:$0xff]
    %v75 = vld [vmem:[#allocation2 + $0x100] sm:$0xff]
    %v76 = vld [vmem:[#allocation2 + $0x108] sm:$0xff]
    %v77 = vld [vmem:[#allocation2 + $0x110] sm:$0xff]
    %v78 = vld [vmem:[#allocation2 + $0x118] sm:$0xff]
    %v79 = vld [vmem:[#allocation2 + $0x120] sm:$0xff]
    %v80 = vld [vmem:[#allocation2 + $0x128] sm:$0xff]
    %v81 = vld [vmem:[#allocation2 + $0x130] sm:$0xff]
    %v82 = vld [vmem:[#allocation2 + $0x138] sm:$0xff]
    %v83 = vld [vmem:[#allocation2 + $0x140] sm:$0xff]
    %v84 = vld [vmem:[#allocation2 + $0x148] sm:$0xff]
    %v85 = vld [vmem:[#allocation2 + $0x150] sm:$0xff]
    %v86 = vld [vmem:[#allocation2 + $0x158] sm:$0xff]
    %v87 = vld [vmem:[#allocation2 + $0x160] sm:$0xff]
    %v88 = vld [vmem:[#allocation2 + $0x168] sm:$0xff]
    %v89 = vld [vmem:[#allocation2 + $0x170] sm:$0xff]
    %v90 = vld [vmem:[#allocation2 + $0x178] sm:$0xff]
    %v91 = vld [vmem:[#allocation2 + $0x180] sm:$0xff]
    %v92 = vld [vmem:[#allocation2 + $0x188] sm:$0xff]
    %v93 = vld [vmem:[#allocation2 + $0x190] sm:$0xff]
    %v94 = vld [vmem:[#allocation2 + $0x198] sm:$0xff]
    %v95 = vld [vmem:[#allocation2 + $0x1a0] sm:$0xff]
    %v96 = vld [vmem:[#allocation2 + $0x1a8] sm:$0xff]
    %v97 = vld [vmem:[#allocation2 + $0x1b0] sm:$0xff]
    %v98 = vld [vmem:[#allocation2 + $0x1b8] sm:$0xff]
    %v99 = vld [vmem:[#allocation2 + $0x1c0] sm:$0xff]
    %v100 = vld [vmem:[#allocation2 + $0x1c8] sm:$0xff]
    %v101 = vld [vmem:[#allocation2 + $0x1d0] sm:$0xff]
    %v102 = vld [vmem:[#allocation2 + $0x1d8] sm:$0xff]
    %v103 = vld [vmem:[#allocation2 + $0x1e0] sm:$0xff]
    %v104 = vld [vmem:[#allocation2 + $0x1e8] sm:$0xff]
    %v105 = vld [vmem:[#allocation2 + $0x1f0] sm:$0xff]
    %v106 = vld [vmem:[#allocation2 + $0x1f8] sm:$0xff]
    %v107 = vld [vmem:[#allocation2 + $0x200] sm:$0xff]
    %v108 = vld [vmem:[#allocation2 + $0x208] sm:$0xff]
    %v109 = vld [vmem:[#allocation2 + $0x210] sm:$0xff]
    %v110 = vld [vmem:[#allocation2 + $0x218] sm:$0xff]
    %v111 = vld [vmem:[#allocation2 + $0x220] sm:$0xff]
    %v112 = vld [vmem:[#allocation2 + $0x228] sm:$0xff]
    %v113 = vld [vmem:[#allocation2 + $0x230] sm:$0xff]
    %v114 = vld [vmem:[#allocation2 + $0x238] sm:$0xff]
    %v115 = vld [vmem:[#allocation2 + $0x240] sm:$0xff]
    %v116 = vld [vmem:[#allocation2 + $0x248] sm:$0xff]
    %v117 = vld [vmem:[#allocation2 + $0x250] sm:$0xff]
    %v118 = vld [vmem:[#allocation2 + $0x258] sm:$0xff]
    %v119 = vld [vmem:[#allocation2 + $0x260] sm:$0xff]
    %v120 = vld [vmem:[#allocation2 + $0x268] sm:$0xff]
    %v121 = vld [vmem:[#allocation2 + $0x270] sm:$0xff]
    %v122 = vld [vmem:[#allocation2 + $0x278] sm:$0xff]
    %v123 = vld [vmem:[#allocation2 + $0x280] sm:$0xff]
    %v124 = vld [vmem:[#allocation2 + $0x288] sm:$0xff]
    %v125 = vld [vmem:[#allocation2 + $0x290] sm:$0xff]
    %v126 = vld [vmem:[#allocation2 + $0x298] sm:$0xff]
    %v127 = vld [vmem:[#allocation2 + $0x2a0] sm:$0xff]
    %v128 = vld [vmem:[#allocation2 + $0x2a8] sm:$0xff]
    %v129 = vld [vmem:[#allocation2 + $0x2b0] sm:$0xff]
    %v130 = vld [vmem:[#allocation2 + $0x2b8] sm:$0xff]
    %v131 = vld [vmem:[#allocation2 + $0x2c0] sm:$0xff]
    %v132 = vld [vmem:[#allocation2 + $0x2c8] sm:$0xff]
    %v133 = vld [vmem:[#allocation2 + $0x2d0] sm:$0xff]
    %v134 = vld [vmem:[#allocation2 + $0x2d8] sm:$0xff]
    %v135 = vld [vmem:[#allocation2 + $0x2e0] sm:$0xff]
    %v136 = vld [vmem:[#allocation2 + $0x2e8] sm:$0xff]
    %v137 = vld [vmem:[#allocation2 + $0x2f0] sm:$0xff]
    %v138 = vld [vmem:[#allocation2 + $0x2f8] sm:$0xff]
    %v139 = vld [vmem:[#allocation2 + $0x300] sm:$0xff]
    %v140 = vld [vmem:[#allocation2 + $0x308] sm:$0xff]
    %v141 = vld [vmem:[#allocation2 + $0x310] sm:$0xff]
    %v142 = vld [vmem:[#allocation2 + $0x318] sm:$0xff]
    %v143 = vld [vmem:[#allocation2 + $0x320] sm:$0xff]
    %v144 = vld [vmem:[#allocation2 + $0x328] sm:$0xff]
    %v145 = vld [vmem:[#allocation2 + $0x330] sm:$0xff]
    %v146 = vld [vmem:[#allocation2 + $0x338] sm:$0xff]
    %v147 = vld [vmem:[#allocation2 + $0x340] sm:$0xff]
    %v148 = vld [vmem:[#allocation2 + $0x348] sm:$0xff]
    %v149 = vld [vmem:[#allocation2 + $0x350] sm:$0xff]
    %v150 = vld [vmem:[#allocation2 + $0x358] sm:$0xff]
    %v151 = vld [vmem:[#allocation2 + $0x360] sm:$0xff]
    %v152 = vld [vmem:[#allocation2 + $0x368] sm:$0xff]
    %v153 = vld [vmem:[#allocation2 + $0x370] sm:$0xff]
    %v154 = vld [vmem:[#allocation2 + $0x378] sm:$0xff]
    %v155 = vld [vmem:[#allocation2 + $0x380] sm:$0xff]
    %v156 = vld [vmem:[#allocation2 + $0x388] sm:$0xff]
    %v157 = vld [vmem:[#allocation2 + $0x390] sm:$0xff]
    %v158 = vld [vmem:[#allocation2 + $0x398] sm:$0xff]
    %v159 = vld [vmem:[#allocation2 + $0x3a0] sm:$0xff]
    %v160 = vld [vmem:[#allocation2 + $0x3a8] sm:$0xff]
    %v161 = vld [vmem:[#allocation2 + $0x3b0] sm:$0xff]
    %v162 = vld [vmem:[#allocation2 + $0x3b8] sm:$0xff]
    %v163 = vld [vmem:[#allocation2 + $0x3c0] sm:$0xff]
    %v164 = vld [vmem:[#allocation2 + $0x3c8] sm:$0xff]
    %v165 = vld [vmem:[#allocation2 + $0x3d0] sm:$0xff]
    %v166 = vld [vmem:[#allocation2 + $0x3d8] sm:$0xff]
    %v167 = vld [vmem:[#allocation2 + $0x3e0] sm:$0xff]
    %v168 = vld [vmem:[#allocation2 + $0x3e8] sm:$0xff]
    %v169 = vld [vmem:[#allocation2 + $0x3f0] sm:$0xff]
    %v170 = vld [vmem:[#allocation2 + $0x3f8] sm:$0xff]
    %v171 = vld [vmem:[%s2] sm:$0x1]
    %v173 = vlaneseq
    %v174 = vshrl.u32 %v173, 7
    %v175 = vsub.s32 0, %v174
    %v176 = vrot.slane %v171, %v175
    %v186 = vcombine.low %v35, %v37
    %v187 = vcombine.high %v35, %v37
    %v188 = vcombine.low %v39, %v41
    %v189 = vcombine.high %v39, %v41
    %v191 = vunpack.c.l.s4 1983009808
    %v192 = vunpack.c.0.s8 %v191
    %v193 = vlaneseq
    %v194 = vshrl.u32 %v193, 7
    %v195 = vsub.s32 %v192, %v194
    %v196 = vrot.slane %v186, %v195
    %v198 = vunpack.c.l.s4 1983009808
    %v199 = vunpack.c.0.s8 %v198
    %v200 = vlaneseq
    %v201 = vshrl.u32 %v200, 7
    %v202 = vsub.s32 %v199, %v201
    %v203 = vrot.slane %v187, %v202
    %v205 = vunpack.c.l.s4 1983009808
    %v206 = vunpack.c.0.s8 %v205
    %v207 = vlaneseq
    %v208 = vshrl.u32 %v207, 7
    %v209 = vsub.s32 %v206, %v208
    %v210 = vrot.slane %v188, %v209
    %v212 = vunpack.c.l.s4 1983009808
    %v213 = vunpack.c.0.s8 %v212
    %v214 = vlaneseq
    %v215 = vshrl.u32 %v214, 7
    %v216 = vsub.s32 %v213, %v215
    %v217 = vrot.slane %v189, %v216
    %v218 = vcombine.low %v196, %v210
    %v219 = vcombine.high %v196, %v210
    %v220 = vcombine.low %v203, %v217
    %v221 = vcombine.high %v203, %v217
    %v222 = vcombine.low %v36, %v38
    %v223 = vcombine.high %v36, %v38
    %v224 = vcombine.low %v40, %v42
    %v225 = vcombine.high %v40, %v42
    %v227 = vunpack.c.l.s4 1983009808
    %v228 = vunpack.c.0.s8 %v227
    %v229 = vlaneseq
    %v230 = vshrl.u32 %v229, 7
    %v231 = vsub.s32 %v228, %v230
    %v232 = vrot.slane %v222, %v231
    %v234 = vunpack.c.l.s4 1983009808
    %v235 = vunpack.c.0.s8 %v234
    %v236 = vlaneseq
    %v237 = vshrl.u32 %v236, 7
    %v238 = vsub.s32 %v235, %v237
    %v239 = vrot.slane %v223, %v238
    %v241 = vunpack.c.l.s4 1983009808
    %v242 = vunpack.c.0.s8 %v241
    %v243 = vlaneseq
    %v244 = vshrl.u32 %v243, 7
    %v245 = vsub.s32 %v242, %v244
    %v246 = vrot.slane %v224, %v245
    %v248 = vunpack.c.l.s4 1983009808
    %v249 = vunpack.c.0.s8 %v248
    %v250 = vlaneseq
    %v251 = vshrl.u32 %v250, 7
    %v252 = vsub.s32 %v249, %v251
    %v253 = vrot.slane %v225, %v252
    %v254 = vcombine.low %v232, %v246
    %v255 = vcombine.high %v232, %v246
    %v256 = vcombine.low %v239, %v253
    %v257 = vcombine.high %v239, %v253
    %266 = vmatprep.subr.mxu0 0.0
    %267 = vmatpush1.msra.mxu0 %v43
    %268 = vmatprep.subr.mxu0 0.0
    %269 = vmatpush1.msra.mxu0 %v44
    %270 = vmatprep.subr.mxu0 0.0
    %271 = vmatpush1.msra.mxu0 %v45
    %272 = vmatprep.subr.mxu0 0.0
    %273 = vmatpush1.msra.mxu0 %v46
    %274 = vmatprep.subr.mxu0 0.0
    %275 = vmatpush1.msra.mxu0 %v47
    %276 = vmatprep.subr.mxu0 0.0
    %277 = vmatpush1.msra.mxu0 %v48
    %278 = vmatprep.subr.mxu0 0.0
    %279 = vmatpush1.msra.mxu0 %v49
    %280 = vmatprep.subr.mxu0 0.0
    %281 = vmatpush1.msra.mxu0 %v50
    %282 = vmatprep.subr.mxu0 0.0
    %283 = vmatpush1.msra.mxu0 %v51
    %284 = vmatprep.subr.mxu0 0.0
    %285 = vmatpush1.msra.mxu0 %v52
    %286 = vmatprep.subr.mxu0 0.0
    %287 = vmatpush1.msra.mxu0 %v53
    %288 = vmatprep.subr.mxu0 0.0
    %289 = vmatpush1.msra.mxu0 %v54
    %290 = vmatprep.subr.mxu0 0.0
    %291 = vmatpush1.msra.mxu0 %v55
    %292 = vmatprep.subr.mxu0 0.0
    %293 = vmatpush1.msra.mxu0 %v56
    %294 = vmatprep.subr.mxu0 0.0
    %295 = vmatpush1.msra.mxu0 %v57
    %296 = vmatprep.subr.mxu0 0.0
    %297 = vmatpush1.msra.mxu0 %v58
    %298 = vmatprep.subr.mxu0 0.0
    %299 = vmatpush1.msra.mxu0 %v59
    %300 = vmatprep.subr.mxu0 0.0
    %301 = vmatpush1.msra.mxu0 %v60
    %302 = vmatprep.subr.mxu0 0.0
    %303 = vmatpush1.msra.mxu0 %v61
    %304 = vmatprep.subr.mxu0 0.0
    %305 = vmatpush1.msra.mxu0 %v62
    %306 = vmatprep.subr.mxu0 0.0
    %307 = vmatpush1.msra.mxu0 %v63
    %308 = vmatprep.subr.mxu0 0.0
    %309 = vmatpush1.msra.mxu0 %v64
    %310 = vmatprep.subr.mxu0 0.0
    %311 = vmatpush1.msra.mxu0 %v65
    %312 = vmatprep.subr.mxu0 0.0
    %313 = vmatpush1.msra.mxu0 %v66
    %314 = vmatprep.subr.mxu0 0.0
    %315 = vmatpush1.msra.mxu0 %v67
    %316 = vmatprep.subr.mxu0 0.0
    %317 = vmatpush1.msra.mxu0 %v68
    %318 = vmatprep.subr.mxu0 0.0
    %319 = vmatpush1.msra.mxu0 %v69
    %320 = vmatprep.subr.mxu0 0.0
    %321 = vmatpush1.msra.mxu0 %v70
    %322 = vmatprep.subr.mxu0 0.0
    %323 = vmatpush1.msra.mxu0 %v71
    %324 = vmatprep.subr.mxu0 0.0
    %325 = vmatpush1.msra.mxu0 %v72
    %326 = vmatprep.subr.mxu0 0.0
    %327 = vmatpush1.msra.mxu0 %v73
    %328 = vmatprep.subr.mxu0 0.0
    %329 = vmatpush1.msra.mxu0 %v74
    %330 = vmatprep.mubr.f32.mxu0 %v219
    %331 = vmatmul.mubr.f32.gmra.mrb[0].mxu0 %v218
    %v332 = vpop.f32.mrb[0].mxu0
    %v333 = vadd.f32 %v176, %v332
    %v334 = vpop.f32.mrb[0].mxu0
    %335 = vdwg.mxu0
    %336 = vmatprep.subr.mxu0 0.0
    %337 = vmatpush1.msra.mxu0 %v75
    %338 = vmatprep.subr.mxu0 0.0
    %339 = vmatpush1.msra.mxu0 %v76
    %340 = vmatprep.subr.mxu0 0.0
    %341 = vmatpush1.msra.mxu0 %v77
    %342 = vmatprep.subr.mxu0 0.0
    %343 = vmatpush1.msra.mxu0 %v78
    %344 = vmatprep.subr.mxu0 0.0
    %345 = vmatpush1.msra.mxu0 %v79
    %346 = vmatprep.subr.mxu0 0.0
    %347 = vmatpush1.msra.mxu0 %v80
    %348 = vmatprep.subr.mxu0 0.0
    %349 = vmatpush1.msra.mxu0 %v81
    %350 = vmatprep.subr.mxu0 0.0
    %351 = vmatpush1.msra.mxu0 %v82
    %352 = vmatprep.subr.mxu0 0.0
    %353 = vmatpush1.msra.mxu0 %v83
    %354 = vmatprep.subr.mxu0 0.0
    %355 = vmatpush1.msra.mxu0 %v84
    %356 = vmatprep.subr.mxu0 0.0
    %357 = vmatpush1.msra.mxu0 %v85
    %358 = vmatprep.subr.mxu0 0.0
    %359 = vmatpush1.msra.mxu0 %v86
    %360 = vmatprep.subr.mxu0 0.0
    %361 = vmatpush1.msra.mxu0 %v87
    %362 = vmatprep.subr.mxu0 0.0
    %363 = vmatpush1.msra.mxu0 %v88
    %364 = vmatprep.subr.mxu0 0.0
    %365 = vmatpush1.msra.mxu0 %v89
    %366 = vmatprep.subr.mxu0 0.0
    %367 = vmatpush1.msra.mxu0 %v90
    %368 = vmatprep.subr.mxu0 0.0
    %369 = vmatpush1.msra.mxu0 %v91
    %370 = vmatprep.subr.mxu0 0.0
    %371 = vmatpush1.msra.mxu0 %v92
    %372 = vmatprep.subr.mxu0 0.0
    %373 = vmatpush1.msra.mxu0 %v93
    %374 = vmatprep.subr.mxu0 0.0
    %375 = vmatpush1.msra.mxu0 %v94
    %376 = vmatprep.subr.mxu0 0.0
    %377 = vmatpush1.msra.mxu0 %v95
    %378 = vmatprep.subr.mxu0 0.0
    %379 = vmatpush1.msra.mxu0 %v96
    %380 = vmatprep.subr.mxu0 0.0
    %381 = vmatpush1.msra.mxu0 %v97
    %382 = vmatprep.subr.mxu0 0.0
    %383 = vmatpush1.msra.mxu0 %v98
    %384 = vmatprep.subr.mxu0 0.0
    %385 = vmatpush1.msra.mxu0 %v99
    %386 = vmatprep.subr.mxu0 0.0
    %387 = vmatpush1.msra.mxu0 %v100
    %388 = vmatprep.subr.mxu0 0.0
    %389 = vmatpush1.msra.mxu0 %v101
    %390 = vmatprep.subr.mxu0 0.0
    %391 = vmatpush1.msra.mxu0 %v102
    %392 = vmatprep.subr.mxu0 0.0
    %393 = vmatpush1.msra.mxu0 %v103
    %394 = vmatprep.subr.mxu0 0.0
    %395 = vmatpush1.msra.mxu0 %v104
    %396 = vmatprep.subr.mxu0 0.0
    %397 = vmatpush1.msra.mxu0 %v105
    %398 = vmatprep.subr.mxu0 0.0
    %399 = vmatpush1.msra.mxu0 %v106
    %400 = vmatprep.mubr.f32.mxu0 %v221
    %401 = vmatmul.mubr.f32.gmra.mrb[0].mxu0 %v220
    %v402 = vpop.f32.mrb[0].mxu0
    %v403 = vadd.f32 %v333, %v402
    %v404 = vpop.f32.mrb[0].mxu0
    %405 = vdwg.mxu0
    %406 = vmatprep.subr.mxu0 0.0
    %407 = vmatpush1.msra.mxu0 %v107
    %408 = vmatprep.subr.mxu0 0.0
    %409 = vmatpush1.msra.mxu0 %v108
    %410 = vmatprep.subr.mxu0 0.0
    %411 = vmatpush1.msra.mxu0 %v109
    %412 = vmatprep.subr.mxu0 0.0
    %413 = vmatpush1.msra.mxu0 %v110
    %414 = vmatprep.subr.mxu0 0.0
    %415 = vmatpush1.msra.mxu0 %v111
    %416 = vmatprep.subr.mxu0 0.0
    %417 = vmatpush1.msra.mxu0 %v112
    %418 = vmatprep.subr.mxu0 0.0
    %419 = vmatpush1.msra.mxu0 %v113
    %420 = vmatprep.subr.mxu0 0.0
    %421 = vmatpush1.msra.mxu0 %v114
    %422 = vmatprep.subr.mxu0 0.0
    %423 = vmatpush1.msra.mxu0 %v115
    %424 = vmatprep.subr.mxu0 0.0
    %425 = vmatpush1.msra.mxu0 %v116
    %426 = vmatprep.subr.mxu0 0.0
    %427 = vmatpush1.msra.mxu0 %v117
    %428 = vmatprep.subr.mxu0 0.0
    %429 = vmatpush1.msra.mxu0 %v118
    %430 = vmatprep.subr.mxu0 0.0
    %431 = vmatpush1.msra.mxu0 %v119
    %432 = vmatprep.subr.mxu0 0.0
    %433 = vmatpush1.msra.mxu0 %v120
    %434 = vmatprep.subr.mxu0 0.0
    %435 = vmatpush1.msra.mxu0 %v121
    %436 = vmatprep.subr.mxu0 0.0
    %437 = vmatpush1.msra.mxu0 %v122
    %438 = vmatprep.subr.mxu0 0.0
    %439 = vmatpush1.msra.mxu0 %v123
    %440 = vmatprep.subr.mxu0 0.0
    %441 = vmatpush1.msra.mxu0 %v124
    %442 = vmatprep.subr.mxu0 0.0
    %443 = vmatpush1.msra.mxu0 %v125
    %444 = vmatprep.subr.mxu0 0.0
    %445 = vmatpush1.msra.mxu0 %v126
    %446 = vmatprep.subr.mxu0 0.0
    %447 = vmatpush1.msra.mxu0 %v127
    %448 = vmatprep.subr.mxu0 0.0
    %449 = vmatpush1.msra.mxu0 %v128
    %450 = vmatprep.subr.mxu0 0.0
    %451 = vmatpush1.msra.mxu0 %v129
    %452 = vmatprep.subr.mxu0 0.0
    %453 = vmatpush1.msra.mxu0 %v130
    %454 = vmatprep.subr.mxu0 0.0
    %455 = vmatpush1.msra.mxu0 %v131
    %456 = vmatprep.subr.mxu0 0.0
    %457 = vmatpush1.msra.mxu0 %v132
    %458 = vmatprep.subr.mxu0 0.0
    %459 = vmatpush1.msra.mxu0 %v133
    %460 = vmatprep.subr.mxu0 0.0
    %461 = vmatpush1.msra.mxu0 %v134
    %462 = vmatprep.subr.mxu0 0.0
    %463 = vmatpush1.msra.mxu0 %v135
    %464 = vmatprep.subr.mxu0 0.0
    %465 = vmatpush1.msra.mxu0 %v136
    %466 = vmatprep.subr.mxu0 0.0
    %467 = vmatpush1.msra.mxu0 %v137
    %468 = vmatprep.subr.mxu0 0.0
    %469 = vmatpush1.msra.mxu0 %v138
    %470 = vmatprep.mubr.f32.mxu0 %v255
    %471 = vmatmul.mubr.f32.gmra.mrb[0].mxu0 %v254
    %v472 = vpop.f32.mrb[0].mxu0
    %v473 = vadd.f32 %v403, %v472
    %v474 = vpop.f32.mrb[0].mxu0
    %475 = vdwg.mxu0
    %476 = vmatprep.subr.mxu0 0.0
    %477 = vmatpush1.msra.mxu0 %v139
    %478 = vmatprep.subr.mxu0 0.0
    %479 = vmatpush1.msra.mxu0 %v140
    %480 = vmatprep.subr.mxu0 0.0
    %481 = vmatpush1.msra.mxu0 %v141
    %482 = vmatprep.subr.mxu0 0.0
    %483 = vmatpush1.msra.mxu0 %v142
    %484 = vmatprep.subr.mxu0 0.0
    %485 = vmatpush1.msra.mxu0 %v143
    %486 = vmatprep.subr.mxu0 0.0
    %487 = vmatpush1.msra.mxu0 %v144
    %488 = vmatprep.subr.mxu0 0.0
    %489 = vmatpush1.msra.mxu0 %v145
    %490 = vmatprep.subr.mxu0 0.0
    %491 = vmatpush1.msra.mxu0 %v146
    %492 = vmatprep.subr.mxu0 0.0
    %493 = vmatpush1.msra.mxu0 %v147
    %494 = vmatprep.subr.mxu0 0.0
    %495 = vmatpush1.msra.mxu0 %v148
    %496 = vmatprep.subr.mxu0 0.0
    %497 = vmatpush1.msra.mxu0 %v149
    %498 = vmatprep.subr.mxu0 0.0
    %499 = vmatpush1.msra.mxu0 %v150
    %500 = vmatprep.subr.mxu0 0.0
    %501 = vmatpush1.msra.mxu0 %v151
    %502 = vmatprep.subr.mxu0 0.0
    %503 = vmatpush1.msra.mxu0 %v152
    %504 = vmatprep.subr.mxu0 0.0
    %505 = vmatpush1.msra.mxu0 %v153
    %506 = vmatprep.subr.mxu0 0.0
    %507 = vmatpush1.msra.mxu0 %v154
    %508 = vmatprep.subr.mxu0 0.0
    %509 = vmatpush1.msra.mxu0 %v155
    %510 = vmatprep.subr.mxu0 0.0
    %511 = vmatpush1.msra.mxu0 %v156
    %512 = vmatprep.subr.mxu0 0.0
    %513 = vmatpush1.msra.mxu0 %v157
    %514 = vmatprep.subr.mxu0 0.0
    %515 = vmatpush1.msra.mxu0 %v158
    %516 = vmatprep.subr.mxu0 0.0
    %517 = vmatpush1.msra.mxu0 %v159
    %518 = vmatprep.subr.mxu0 0.0
    %519 = vmatpush1.msra.mxu0 %v160
    %520 = vmatprep.subr.mxu0 0.0
    %521 = vmatpush1.msra.mxu0 %v161
    %522 = vmatprep.subr.mxu0 0.0
    %523 = vmatpush1.msra.mxu0 %v162
    %524 = vmatprep.subr.mxu0 0.0
    %525 = vmatpush1.msra.mxu0 %v163
    %526 = vmatprep.subr.mxu0 0.0
    %527 = vmatpush1.msra.mxu0 %v164
    %528 = vmatprep.subr.mxu0 0.0
    %529 = vmatpush1.msra.mxu0 %v165
    %530 = vmatprep.subr.mxu0 0.0
    %531 = vmatpush1.msra.mxu0 %v166
    %532 = vmatprep.subr.mxu0 0.0
    %533 = vmatpush1.msra.mxu0 %v167
    %534 = vmatprep.subr.mxu0 0.0
    %535 = vmatpush1.msra.mxu0 %v168
    %536 = vmatprep.subr.mxu0 0.0
    %537 = vmatpush1.msra.mxu0 %v169
    %538 = vmatprep.subr.mxu0 0.0
    %539 = vmatpush1.msra.mxu0 %v170
    %540 = vmatprep.mubr.f32.mxu0 %v257
    %541 = vmatmul.mubr.f32.gmra.mrb[0].mxu0 %v256
    %v542 = vpop.f32.mrb[0].mxu0
    %v543 = vadd.f32 %v473, %v542
    %v544 = vpop.f32.mrb[0].mxu0
    %545 = vdwg.mxu0
    %v546 = vmax.f32 %v543, 0.0
    %v547 = vld [vmem:[%s3] sm:$0xff]
    %v548 = vld [vmem:[%s3 + $0x8] sm:$0xff]
    %v549 = vld [vmem:[%s3 + $0x10] sm:$0xff]
    %v550 = vld [vmem:[%s3 + $0x18] sm:$0xff]
    %v551 = vld [vmem:[%s3 + $0x20] sm:$0xff]
    %v552 = vld [vmem:[%s3 + $0x28] sm:$0xff]
    %v553 = vld [vmem:[%s3 + $0x30] sm:$0xff]
    %v554 = vld [vmem:[%s3 + $0x38] sm:$0xff]
    %v555 = vld [vmem:[%s3 + $0x40] sm:$0xff]
    %v556 = vld [vmem:[%s3 + $0x48] sm:$0xff]
    %v557 = vld [vmem:[%s3 + $0x50] sm:$0xff]
    %v558 = vld [vmem:[%s3 + $0x58] sm:$0xff]
    %v559 = vld [vmem:[%s3 + $0x60] sm:$0xff]
    %v560 = vld [vmem:[%s3 + $0x68] sm:$0xff]
    %v561 = vld [vmem:[%s3 + $0x70] sm:$0xff]
    %v562 = vld [vmem:[%s3 + $0x78] sm:$0xff]
    %v563 = vld [vmem:[%s4] sm:$0x1]
    %v565 = vlaneseq
    %v566 = vshrl.u32 %v565, 7
    %v567 = vsub.s32 0, %v566
    %v568 = vrot.slane %v563, %v567
    %570 = vmatprep.subr.mxu0 0.0
    %571 = vmatpush1.msra.mxu0 %v547
    %572 = vmatprep.subr.mxu0 0.0
    %573 = vmatpush1.msra.mxu0 %v548
    %574 = vmatprep.subr.mxu0 0.0
    %575 = vmatpush1.msra.mxu0 %v549
    %576 = vmatprep.subr.mxu0 0.0
    %577 = vmatpush1.msra.mxu0 %v550
    %578 = vmatprep.subr.mxu0 0.0
    %579 = vmatpush1.msra.mxu0 %v551
    %580 = vmatprep.subr.mxu0 0.0
    %581 = vmatpush1.msra.mxu0 %v552
    %582 = vmatprep.subr.mxu0 0.0
    %583 = vmatpush1.msra.mxu0 %v553
    %584 = vmatprep.subr.mxu0 0.0
    %585 = vmatpush1.msra.mxu0 %v554
    %586 = vmatprep.subr.mxu0 0.0
    %587 = vmatpush1.msra.mxu0 %v555
    %588 = vmatprep.subr.mxu0 0.0
    %589 = vmatpush1.msra.mxu0 %v556
    %590 = vmatprep.subr.mxu0 0.0
    %591 = vmatpush1.msra.mxu0 %v557
    %592 = vmatprep.subr.mxu0 0.0
    %593 = vmatpush1.msra.mxu0 %v558
    %594 = vmatprep.subr.mxu0 0.0
    %595 = vmatpush1.msra.mxu0 %v559
    %596 = vmatprep.subr.mxu0 0.0
    %597 = vmatpush1.msra.mxu0 %v560
    %598 = vmatprep.subr.mxu0 0.0
    %599 = vmatpush1.msra.mxu0 %v561
    %600 = vmatprep.subr.mxu0 0.0
    %601 = vmatpush1.msra.mxu0 %v562
    %602 = vmatprep.subr.mxu0 0.0
    %603 = vmatpush1.msra.mxu0 0.0
    %604 = vmatprep.subr.mxu0 0.0
    %605 = vmatpush1.msra.mxu0 0.0
    %606 = vmatprep.subr.mxu0 0.0
    %607 = vmatpush1.msra.mxu0 0.0
    %608 = vmatprep.subr.mxu0 0.0
    %609 = vmatpush1.msra.mxu0 0.0
    %610 = vmatprep.subr.mxu0 0.0
    %611 = vmatpush1.msra.mxu0 0.0
    %612 = vmatprep.subr.mxu0 0.0
    %613 = vmatpush1.msra.mxu0 0.0
    %614 = vmatprep.subr.mxu0 0.0
    %615 = vmatpush1.msra.mxu0 0.0
    %616 = vmatprep.subr.mxu0 0.0
    %617 = vmatpush1.msra.mxu0 0.0
    %618 = vmatprep.subr.mxu0 0.0
    %619 = vmatpush1.msra.mxu0 0.0
    %620 = vmatprep.subr.mxu0 0.0
    %621 = vmatpush1.msra.mxu0 0.0
    %622 = vmatprep.subr.mxu0 0.0
    %623 = vmatpush1.msra.mxu0 0.0
    %624 = vmatprep.subr.mxu0 0.0
    %625 = vmatpush1.msra.mxu0 0.0
    %626 = vmatprep.subr.mxu0 0.0
    %627 = vmatpush1.msra.mxu0 0.0
    %628 = vmatprep.subr.mxu0 0.0
    %629 = vmatpush1.msra.mxu0 0.0
    %630 = vmatprep.subr.mxu0 0.0
    %631 = vmatpush1.msra.mxu0 0.0
    %632 = vmatprep.subr.mxu0 0.0
    %633 = vmatpush1.msra.mxu0 0.0
    %634 = vmatprep.mubr.f32.mxu0 0.0
    %635 = vmatmul.mubr.f32.gmra.mrb[0].mxu0 %v546
    %v636 = vpop.f32.mrb[0].mxu0
    %v637 = vadd.f32 %v568, %v636
    %v638 = vpop.f32.mrb[0].mxu0
    %639 = vdwg.mxu0
    %640 = vst [vmem:[#allocation5] sm:$0xff] %v637
    // Predicated region
    $region26: #{net_forward.1} parent=1 // pred_check
      _
    $region27: #{net_forward.1} parent=1 // pred_check_branch
      %642 = sbr.rel (0) target = $region29
    $region28: #{net_forward.1} parent=1 // pred_region
      %s644 = ssub.s32 128, 32
      %645 = vsyncadd [#allocation4], %s644
      %s646 = sshll.u32 [#allocation5], 4
      %s647 = int_to_ptr.vmem [resolvable:$true] %s646
      %652 = dma.vmem_to_hbm [thread:$0]  %s647, 32, %s5, [#allocation4], 32, 32, 2
    $region29: #{net_forward.1} parent=1 // pred_fallthru
      _
    // Predicated region
    $region30: #{net_forward.1} parent=1 // pred_check
      _
    $region31: #{net_forward.1} parent=1 // pred_check_branch
      %654 = sbr.rel (0) target = $region33
    $region32: #{net_forward.1} parent=1 // pred_region
      %655 = dma.done [#allocation4], 128
    $region33: #{net_forward.1} parent=1 // pred_fallthru
      _
    %656 = vsyncpa [#allocation3], 1
    %657 = vsyncpa [#allocation4], 1

</llo_original>
